<compile_context>
chip_gen: v7x
topology: tpu7x:2x2x1
jax: 0.10.0
libtpu: 0.0.40
codegen_flags: <defaults>
</compile_context>

<pallas_src>
import functools

import numpy as np
import jax
import jax.numpy as jnp
from jax.experimental import pallas as pl
from jax.experimental.pallas import tpu as pltpu


# ----------------------------------------------------------------------------
# Pallas kernel: one (batch, output-pixel-tile) step.
# ----------------------------------------------------------------------------
def _affine_sample_kernel(theta_ref, coords_ref, x_ref, mask_ref, o_ref,
                          *, H, W, C, contract_axis):
    """
    theta_ref : SMEM f32[B*6]         row-major 2x3 affine params per image
    coords_ref: VMEM f32[1, 2, P]     rows: xs (flip already folded in), ys
    x_ref     : VMEM bf16[1, C*Mk, K] image rows, channel-major over the kept axis
    mask_ref  : VMEM f32[1, 1, P]     drop-block keep mask for this tile
    o_ref     : VMEM [1, C, P]        output tile
    """
    b = pl.program_id(0)
    base = b * 6
    t00 = theta_ref[base + 0]
    t01 = theta_ref[base + 1]
    t02 = theta_ref[base + 2]
    t10 = theta_ref[base + 3]
    t11 = theta_ref[base + 4]
    t12 = theta_ref[base + 5]

    c2 = coords_ref[0]                     # (2, P)
    xs = c2[0:1, :]                        # flip-selected output column coords
    ys = c2[1:2, :]
    P = xs.shape[1]

    # F.affine_grid (align_corners=False)
    gx = t00 * xs + t01 * ys + t02
    gy = t10 * xs + t11 * ys + t12

    # F.grid_sample (align_corners=False): normalized -> input pixel coords
    ix = ((gx + 1.0) * W - 1.0) * 0.5
    iy = ((gy + 1.0) * H - 1.0) * 0.5

    x0f = jnp.floor(ix)
    y0f = jnp.floor(iy)
    fx = ix - x0f
    fy = iy - y0f
    x0 = x0f.astype(jnp.int32)
    y0 = y0f.astype(jnp.int32)
    x1 = x0 + 1
    y1 = y0 + 1

    # Separable bilinear-with-zero-padding weights: w(y, x | p) = ry[y, p] * rx[x, p].
    # Construction is O((H+W)*P), all f32 on the VPU; nothing of size HW^2 materialized.
    xcol = jax.lax.broadcasted_iota(jnp.int32, (W, P), 0)
    wx0 = jnp.where((x0 >= 0) & (x0 < W), 1.0 - fx, 0.0)
    wx1 = jnp.where((x1 >= 0) & (x1 < W), fx, 0.0)
    rx = jnp.where(xcol == x0, wx0, 0.0) + jnp.where(xcol == x1, wx1, 0.0)    # (W, P)

    yrow = jax.lax.broadcasted_iota(jnp.int32, (H, P), 0)
    wy0 = jnp.where((y0 >= 0) & (y0 < H), 1.0 - fy, 0.0)
    wy1 = jnp.where((y1 >= 0) & (y1 < H), fy, 0.0)
    ry = jnp.where(yrow == y0, wy0, 0.0) + jnp.where(yrow == y1, wy1, 0.0)    # (H, P)

    # The larger spatial axis is contracted on the MXU (K = max(H, W)); the smaller one
    # is contracted on the VPU/XLU as a weighted sublane reduce.
    if contract_axis == "x":
        w_mxu, w_vpu, m_keep = rx, ry, H
    else:
        w_mxu, w_vpu, m_keep = ry, rx, W

    # (C*Mk, K) @ (K, P) -> (C*Mk, P); bf16 operands (image pre-cast on host), f32 accum.
    t_ch = jnp.dot(x_ref[0], w_mxu.astype(jnp.bfloat16),
                   preferred_element_type=jnp.float32)

    if m_keep % 8 == 0:
        # Sublane-tile-aligned reshape (free view) + single fused multiply/reduce.
        out = jnp.sum(t_ch.reshape(C, m_keep, P) * w_vpu[None, :, :], axis=1)   # (C, P)
    else:
        # Fallback for non-multiple-of-8 kept axis: per-channel sublane reduce.
        rows = [jnp.sum(t_ch[c * m_keep:(c + 1) * m_keep, :] * w_vpu,
                        axis=0, keepdims=True) for c in range(C)]
        out = jnp.concatenate(rows, axis=0)

    # drop_blocks zero-mask (broadcast over channels), lane-dense store.
    o_ref[0] = (out * mask_ref[0]).astype(o_ref.dtype)


# ----------------------------------------------------------------------------
# VMEM-aware tile selection.
# ----------------------------------------------------------------------------
def _vmem_estimate_bytes(P, C, H, W, x_buf_count):
    mk, k = min(H, W), max(H, W)
    x_block = C * mk * k * 2 * x_buf_count        # bf16 resident image block(s)
    t_ch = C * mk * P * 4                         # MXU result
    weights = 2 * (H + W) * P * 4                 # rx/ry + temporaries (rough)
    coords = 2 * P * 4 * 2                        # double-buffered
    mask = P * 4 * 2
    out = C * P * 4 * 2
    return x_block + t_ch + weights + coords + mask + out + (2 << 20)


def _choose_p_tile(HW, C, H, W, x_buf_count, budget_bytes=48 << 20):
    cands = [p for p in (2048, 1024, 512, 256, 128) if HW % p == 0]
    for p in cands:
        if _vmem_estimate_bytes(p, C, H, W, x_buf_count) <= budget_bytes:
            return p
    return cands[-1] if cands else HW


# ----------------------------------------------------------------------------
# Wrapper.
# ----------------------------------------------------------------------------
def affine_transform_pallas(x, theta, flip_flags, drop_mask):
    """x: (B,C,H,W) f32, theta: (B,2,3) f32, flip_flags: (B,) {0,1},
    drop_mask: (B,H,W) f32 (1 keep / 0 drop)."""
    B, C, H, W = x.shape
    HW = H * W

    # Contract the larger spatial axis on the MXU.
    contract_axis = "y" if H > W else "x"
    if contract_axis == "x":
        x_rows = x.reshape(B, C * H, W).astype(jnp.bfloat16)
        m_keep, k_dim = H, W
    else:
        x_rows = jnp.transpose(x, (0, 1, 3, 2)).reshape(B, C * W, H).astype(jnp.bfloat16)
        m_keep, k_dim = W, H

    # Single-buffer the image block when it is large: it only changes once per batch
    # step, so the exposed DMA is amortized over all P tiles (frees VMEM on v7x).
    x_block_bytes = C * m_keep * k_dim * 2
    x_buf_count = 1 if 2 * x_block_bytes > (16 << 20) else 2

    P = _choose_p_tile(HW, C, H, W, x_buf_count)
    n_p = max(1, HW // P)

    theta_flat = theta.reshape(B * 6).astype(jnp.float32)      # 1-D SMEM (no 2-D padding)
    flip_i32 = flip_flags.reshape(B).astype(jnp.int32)

    # Per-batch normalized output coords with the horizontal flip folded into the
    # sampling column (flip-after-grid_sample == sample at column W-1-j).
    p_idx = jnp.arange(HW, dtype=jnp.int32)
    i = p_idx // W
    j = p_idx % W
    j_eff = jnp.where(flip_i32[:, None] > 0, (W - 1) - j[None, :], j[None, :])
    xs = (2.0 * j_eff.astype(jnp.float32) + 1.0) / W - 1.0                      # (B, HW)
    ys = jnp.broadcast_to(((2.0 * i.astype(jnp.float32) + 1.0) / H - 1.0)[None, :],
                          (B, HW))
    coords = jnp.stack([xs, ys], axis=1)                                        # (B, 2, HW)

    mask_flat = drop_mask.reshape(B, 1, HW).astype(jnp.float32)

    x_spec_kwargs = {}
    if x_buf_count == 1:
        x_spec_kwargs = dict(pipeline_mode=pl.Buffered(1))
    x_spec = pl.BlockSpec((1, C * m_keep, k_dim), lambda b, t: (b, 0, 0),
                          **x_spec_kwargs)

    est = _vmem_estimate_bytes(P, C, H, W, x_buf_count)
    vmem_limit = int(min(64 << 20, max(32 << 20, est + (8 << 20))))   # v7x-safe cap

    out_flat = pl.pallas_call(
        functools.partial(_affine_sample_kernel, H=H, W=W, C=C,
                          contract_axis=contract_axis),
        out_shape=jax.ShapeDtypeStruct((B, C, HW), x.dtype),
        grid_spec=pltpu.PrefetchScalarGridSpec(
            num_scalar_prefetch=0,
            grid=(B, n_p),
            in_specs=[
                pl.BlockSpec(memory_space=pltpu.MemorySpace.SMEM),   # theta (whole, 1-D)
                pl.BlockSpec((1, 2, P), lambda b, t: (b, 0, t)),     # coords tile
                x_spec,                                              # image (batch-resident)
                pl.BlockSpec((1, 1, P), lambda b, t: (b, 0, t)),     # drop-mask tile
            ],
            out_specs=pl.BlockSpec((1, C, P), lambda b, t: (b, 0, t)),
        ),
        compiler_params=pltpu.CompilerParams(
            dimension_semantics=("parallel", "arbitrary"),
            vmem_limit_bytes=vmem_limit),
    )(theta_flat, coords, x_rows, mask_flat)
    return out_flat.reshape(B, C, H, W)


# ----------------------------------------------------------------------------
# Pure-JAX reference (f32) for correctness checking.
# ----------------------------------------------------------------------------
def _reference(x, theta, flip_flags, drop_mask):
    B, C, H, W = x.shape
    ii = jnp.broadcast_to(jnp.arange(H)[None, :, None], (B, H, W)).astype(jnp.float32)
    jj = jnp.broadcast_to(jnp.arange(W)[None, None, :], (B, H, W))
    j_eff = jnp.where(flip_flags[:, None, None] > 0, W - 1 - jj, jj).astype(jnp.float32)
    xs = (2.0 * j_eff + 1.0) / W - 1.0
    ys = (2.0 * ii + 1.0) / H - 1.0
    gx = theta[:, 0, 0, None, None] * xs + theta[:, 0, 1, None, None] * ys + theta[:, 0, 2, None, None]
    gy = theta[:, 1, 0, None, None] * xs + theta[:, 1, 1, None, None] * ys + theta[:, 1, 2, None, None]
    ix = ((gx + 1.0) * W - 1.0) * 0.5
    iy = ((gy + 1.0) * H - 1.0) * 0.5
    x0 = jnp.floor(ix)
    y0 = jnp.floor(iy)
    fx = ix - x0
    fy = iy - y0
    x0 = x0.astype(jnp.int32)
    y0 = y0.astype(jnp.int32)
    bidx = jnp.arange(B)[:, None, None, None]
    cidx = jnp.arange(C)[None, :, None, None]

    def corner(yc, xc, w):
        inb = ((xc >= 0) & (xc < W) & (yc >= 0) & (yc < H)).astype(x.dtype)
        ycl = jnp.clip(yc, 0, H - 1)
        xcl = jnp.clip(xc, 0, W - 1)
        v = x[bidx, cidx, ycl[:, None, :, :], xcl[:, None, :, :]]
        return v * (w * inb)[:, None, :, :]

    out = (corner(y0, x0, (1.0 - fy) * (1.0 - fx)) + corner(y0, x0 + 1, (1.0 - fy) * fx)
           + corner(y0 + 1, x0, fy * (1.0 - fx)) + corner(y0 + 1, x0 + 1, fy * fx))
    return out * drop_mask[:, None, :, :]


# ----------------------------------------------------------------------------
# Host-side deterministic parameter / mask generation (mirrors __init__ and the
# numpy drop_blocks / flip logic — pure glue, not the hot path).
# ----------------------------------------------------------------------------
def build_theta(batch_size, scale=0.05, rng=None):
    rng = rng or np.random
    theta = np.zeros((batch_size, 2, 3), dtype=np.float32)
    random_rotation = (rng.rand(batch_size) - 0.5) * 2 * scale
    random_translation = (rng.rand(batch_size, 2) - 0.5) * 2 * scale
    random_scaling = 1 + (rng.rand(batch_size, 2) - 0.5) * 2 * scale
    for i in range(batch_size):
        r = random_rotation[i]
        rot = np.array([[np.cos(r), -np.sin(r), random_translation[i, 0]],
                        [np.sin(r),  np.cos(r), random_translation[i, 1]]],
                       dtype=np.float32)
        sc = np.diag(np.array([random_scaling[i, 0], random_scaling[i, 1], 1.0],
                              dtype=np.float32))
        theta[i] = rot @ sc
    return theta


def euclidean_distance(p1, p2):
    return np.sqrt((p1[0] - p2[0]) ** 2 + (p1[1] - p2[1]) ** 2)


def drop_block_mask(H, W):
    """Replicates drop_blocks() as an (H, W) {0,1} mask; the zeroing happens in-kernel."""
    mask = np.ones((H, W), dtype=np.float32)
    points = np.random.randint(0, H, size=(6, 2))
    pairs = []
    for _ in range(3):
        distances = {}
        for i in range(len(points)):
            for j in range(i + 1, len(points)):
                if {i, j}.isdisjoint(set(sum(pairs, ()))):
                    distances[i, j] = euclidean_distance(points[i], points[j])
        nearest_pair = min(distances, key=distances.get)
        pairs.append(nearest_pair)
    for (a, b) in pairs:
        x1, y1 = points[a]
        x2, y2 = points[b]
        x_min, x_max = min(x1, x2), max(x1, x2)
        y_min, y_max = min(y1, y2), max(y1, y2)
        mask[x_min:x_max + 1, y_min:y_max + 1] = 0.0
    return mask


if __name__ == "__main__":
    B, C, H, W = 2, 4, 16, 16

    np.random.seed(0)
    theta_np = build_theta(B, scale=0.05)

    flip_idx = np.random.permutation(B)[:B // 2]
    flip_flags_np = np.zeros((B,), dtype=np.int32)
    flip_flags_np[flip_idx] = 1

    drop_mask_np = np.stack([drop_block_mask(H, W) for _ in range(B)], axis=0)

    x = jax.random.normal(jax.random.PRNGKey(0), (B, C, H, W), dtype=jnp.float32)
    theta_j = jnp.asarray(theta_np)
    flip_j = jnp.asarray(flip_flags_np)
    mask_j = jnp.asarray(drop_mask_np)

    out = affine_transform_pallas(x, theta_j, flip_j, mask_j)
    out = jax.block_until_ready(out)

    ref = jax.block_until_ready(_reference(x, theta_j, flip_j, mask_j))

    assert out.shape == (B, C, H, W) and bool(jnp.all(jnp.isfinite(out)))
    # bf16 image + bf16 interpolation weights (f32 accumulation) -> loose tolerance
    # vs. the f32 reference; keep the matmul f32 if PyTorch-f32 parity is required.
    np.testing.assert_allclose(np.asarray(out), np.asarray(ref), atol=5e-2, rtol=5e-2)
    print("KERNEL_OK")
</pallas_src>

<mosaic_0001>
module attributes {stable_mosaic.version = 11 : i64} {
  func.func @_affine_sample_kernel(%arg0: i32, %arg1: i32, %arg2: memref<12xf32, #tpu.memory_space<smem>>, %arg3: memref<1x2x256xf32, #tpu.memory_space<vmem>>, %arg4: memref<1x64x16xbf16, #tpu.memory_space<vmem>>, %arg5: memref<1x1x256xf32, #tpu.memory_space<vmem>>, %arg6: memref<1x4x256xf32, #tpu.memory_space<vmem>>) attributes {dimension_semantics = [#tpu.dimension_semantics<parallel>, #tpu.dimension_semantics<arbitrary>], iteration_bounds = array<i64: 2, 1>, scalar_prefetch = 0 : i64, scratch_operands = 0 : i64, tpu.core_type = #tpu.core_type<tc>, window_params = [{transform_indices = @transform_0, window_bounds = array<i64: 12>}, {transform_indices = @transform_1, window_bounds = array<i64: 1, 2, 256>}, {transform_indices = @transform_2, window_bounds = array<i64: 1, 64, 16>}, {transform_indices = @transform_3, window_bounds = array<i64: 1, 1, 256>}, {transform_indices = @transform_4, window_bounds = array<i64: 1, 4, 256>}]} {
    %c6_i32 = arith.constant 6 : i32
    %0 = arith.muli %arg0, %c6_i32 : i32
    %c0_i32 = arith.constant 0 : i32
    %1 = arith.addi %0, %c0_i32 : i32
    %2 = arith.index_cast %1 : i32 to index
    %3 = memref.load %arg2[%2] : memref<12xf32, #tpu.memory_space<smem>>
    %c1_i32 = arith.constant 1 : i32
    %4 = arith.addi %0, %c1_i32 : i32
    %5 = arith.index_cast %4 : i32 to index
    %6 = memref.load %arg2[%5] : memref<12xf32, #tpu.memory_space<smem>>
    %c2_i32 = arith.constant 2 : i32
    %7 = arith.addi %0, %c2_i32 : i32
    %8 = arith.index_cast %7 : i32 to index
    %9 = memref.load %arg2[%8] : memref<12xf32, #tpu.memory_space<smem>>
    %c3_i32 = arith.constant 3 : i32
    %10 = arith.addi %0, %c3_i32 : i32
    %11 = arith.index_cast %10 : i32 to index
    %12 = memref.load %arg2[%11] : memref<12xf32, #tpu.memory_space<smem>>
    %c4_i32 = arith.constant 4 : i32
    %13 = arith.addi %0, %c4_i32 : i32
    %14 = arith.index_cast %13 : i32 to index
    %15 = memref.load %arg2[%14] : memref<12xf32, #tpu.memory_space<smem>>
    %c5_i32 = arith.constant 5 : i32
    %16 = arith.addi %0, %c5_i32 : i32
    %17 = arith.index_cast %16 : i32 to index
    %18 = memref.load %arg2[%17] : memref<12xf32, #tpu.memory_space<smem>>
    %c0 = arith.constant 0 : index
    %c0_0 = arith.constant 0 : index
    %c0_1 = arith.constant 0 : index
    %19 = vector.load %arg3[%c0, %c0_0, %c0_1] : memref<1x2x256xf32, #tpu.memory_space<vmem>>, vector<1x2x256xf32>
    %20 = vector.shape_cast %19 : vector<1x2x256xf32> to vector<2x256xf32>
    %21 = vector.extract_strided_slice %20 {offsets = [0, 0], sizes = [1, 256], strides = [1, 1]} : vector<2x256xf32> to vector<1x256xf32>
    %22 = vector.extract_strided_slice %20 {offsets = [1, 0], sizes = [1, 256], strides = [1, 1]} : vector<2x256xf32> to vector<1x256xf32>
    %23 = vector.broadcast %3 : f32 to vector<1x256xf32>
    %24 = arith.mulf %23, %21 : vector<1x256xf32>
    %25 = vector.broadcast %6 : f32 to vector<1x256xf32>
    %26 = arith.mulf %25, %22 : vector<1x256xf32>
    %27 = arith.addf %24, %26 : vector<1x256xf32>
    %28 = vector.broadcast %9 : f32 to vector<1x256xf32>
    %29 = arith.addf %27, %28 : vector<1x256xf32>
    %30 = vector.broadcast %12 : f32 to vector<1x256xf32>
    %31 = arith.mulf %30, %21 : vector<1x256xf32>
    %32 = vector.broadcast %15 : f32 to vector<1x256xf32>
    %33 = arith.mulf %32, %22 : vector<1x256xf32>
    %34 = arith.addf %31, %33 : vector<1x256xf32>
    %35 = vector.broadcast %18 : f32 to vector<1x256xf32>
    %36 = arith.addf %34, %35 : vector<1x256xf32>
    %cst = arith.constant 1.000000e+00 : f32
    %37 = vector.broadcast %cst : f32 to vector<1x256xf32>
    %38 = arith.addf %29, %37 : vector<1x256xf32>
    %cst_2 = arith.constant 1.600000e+01 : f32
    %39 = vector.broadcast %cst_2 : f32 to vector<1x256xf32>
    %40 = arith.mulf %38, %39 : vector<1x256xf32>
    %cst_3 = arith.constant 1.000000e+00 : f32
    %41 = vector.broadcast %cst_3 : f32 to vector<1x256xf32>
    %42 = arith.subf %40, %41 : vector<1x256xf32>
    %cst_4 = arith.constant 5.000000e-01 : f32
    %43 = vector.broadcast %cst_4 : f32 to vector<1x256xf32>
    %44 = arith.mulf %42, %43 : vector<1x256xf32>
    %cst_5 = arith.constant 1.000000e+00 : f32
    %45 = vector.broadcast %cst_5 : f32 to vector<1x256xf32>
    %46 = arith.addf %36, %45 : vector<1x256xf32>
    %cst_6 = arith.constant 1.600000e+01 : f32
    %47 = vector.broadcast %cst_6 : f32 to vector<1x256xf32>
    %48 = arith.mulf %46, %47 : vector<1x256xf32>
    %cst_7 = arith.constant 1.000000e+00 : f32
    %49 = vector.broadcast %cst_7 : f32 to vector<1x256xf32>
    %50 = arith.subf %48, %49 : vector<1x256xf32>
    %cst_8 = arith.constant 5.000000e-01 : f32
    %51 = vector.broadcast %cst_8 : f32 to vector<1x256xf32>
    %52 = arith.mulf %50, %51 : vector<1x256xf32>
    %53 = math.floor %44 : vector<1x256xf32>
    %54 = math.floor %52 : vector<1x256xf32>
    %55 = arith.subf %44, %53 : vector<1x256xf32>
    %56 = arith.subf %52, %54 : vector<1x256xf32>
    %57 = arith.fptosi %53 : vector<1x256xf32> to vector<1x256xi32>
    %58 = arith.fptosi %54 : vector<1x256xf32> to vector<1x256xi32>
    %c1_i32_9 = arith.constant 1 : i32
    %59 = vector.broadcast %c1_i32_9 : i32 to vector<1x256xi32>
    %60 = arith.addi %57, %59 : vector<1x256xi32>
    %c1_i32_10 = arith.constant 1 : i32
    %61 = vector.broadcast %c1_i32_10 : i32 to vector<1x256xi32>
    %62 = arith.addi %58, %61 : vector<1x256xi32>
    %63 = tpu.iota {dimensions = array<i32: 0>} : vector<16x256xi32>
    %c0_i32_11 = arith.constant 0 : i32
    %64 = vector.broadcast %c0_i32_11 : i32 to vector<1x256xi32>
    %65 = arith.cmpi sge, %57, %64 : vector<1x256xi32>
    %c16_i32 = arith.constant 16 : i32
    %66 = vector.broadcast %c16_i32 : i32 to vector<1x256xi32>
    %67 = arith.cmpi slt, %57, %66 : vector<1x256xi32>
    %68 = arith.andi %65, %67 : vector<1x256xi1>
    %cst_12 = arith.constant 1.000000e+00 : f32
    %69 = vector.broadcast %cst_12 : f32 to vector<1x256xf32>
    %70 = arith.subf %69, %55 : vector<1x256xf32>
    %cst_13 = arith.constant 0.000000e+00 : f32
    %71 = vector.broadcast %cst_13 : f32 to vector<1x256xf32>
    %72 = arith.select %68, %70, %71 : vector<1x256xi1>, vector<1x256xf32>
    %c0_i32_14 = arith.constant 0 : i32
    %73 = vector.broadcast %c0_i32_14 : i32 to vector<1x256xi32>
    %74 = arith.cmpi sge, %60, %73 : vector<1x256xi32>
    %c16_i32_15 = arith.constant 16 : i32
    %75 = vector.broadcast %c16_i32_15 : i32 to vector<1x256xi32>
    %76 = arith.cmpi slt, %60, %75 : vector<1x256xi32>
    %77 = arith.andi %74, %76 : vector<1x256xi1>
    %cst_16 = arith.constant 0.000000e+00 : f32
    %78 = vector.broadcast %cst_16 : f32 to vector<1x256xf32>
    %79 = arith.select %77, %55, %78 : vector<1x256xi1>, vector<1x256xf32>
    %80 = vector.broadcast %57 : vector<1x256xi32> to vector<16x256xi32>
    %81 = arith.cmpi eq, %63, %80 : vector<16x256xi32>
    %cst_17 = arith.constant 0.000000e+00 : f32
    %82 = vector.shape_cast %72 : vector<1x256xf32> to vector<1x256xf32>
    %83 = vector.broadcast %82 : vector<1x256xf32> to vector<16x256xf32>
    %84 = vector.broadcast %cst_17 : f32 to vector<16x256xf32>
    %85 = arith.select %81, %83, %84 : vector<16x256xi1>, vector<16x256xf32>
    %86 = vector.broadcast %60 : vector<1x256xi32> to vector<16x256xi32>
    %87 = arith.cmpi eq, %63, %86 : vector<16x256xi32>
    %cst_18 = arith.constant 0.000000e+00 : f32
    %88 = vector.shape_cast %79 : vector<1x256xf32> to vector<1x256xf32>
    %89 = vector.broadcast %88 : vector<1x256xf32> to vector<16x256xf32>
    %90 = vector.broadcast %cst_18 : f32 to vector<16x256xf32>
    %91 = arith.select %87, %89, %90 : vector<16x256xi1>, vector<16x256xf32>
    %92 = arith.addf %85, %91 : vector<16x256xf32>
    %93 = tpu.iota {dimensions = array<i32: 0>} : vector<16x256xi32>
    %c0_i32_19 = arith.constant 0 : i32
    %94 = vector.broadcast %c0_i32_19 : i32 to vector<1x256xi32>
    %95 = arith.cmpi sge, %58, %94 : vector<1x256xi32>
    %c16_i32_20 = arith.constant 16 : i32
    %96 = vector.broadcast %c16_i32_20 : i32 to vector<1x256xi32>
    %97 = arith.cmpi slt, %58, %96 : vector<1x256xi32>
    %98 = arith.andi %95, %97 : vector<1x256xi1>
    %cst_21 = arith.constant 1.000000e+00 : f32
    %99 = vector.broadcast %cst_21 : f32 to vector<1x256xf32>
    %100 = arith.subf %99, %56 : vector<1x256xf32>
    %cst_22 = arith.constant 0.000000e+00 : f32
    %101 = vector.broadcast %cst_22 : f32 to vector<1x256xf32>
    %102 = arith.select %98, %100, %101 : vector<1x256xi1>, vector<1x256xf32>
    %c0_i32_23 = arith.constant 0 : i32
    %103 = vector.broadcast %c0_i32_23 : i32 to vector<1x256xi32>
    %104 = arith.cmpi sge, %62, %103 : vector<1x256xi32>
    %c16_i32_24 = arith.constant 16 : i32
    %105 = vector.broadcast %c16_i32_24 : i32 to vector<1x256xi32>
    %106 = arith.cmpi slt, %62, %105 : vector<1x256xi32>
    %107 = arith.andi %104, %106 : vector<1x256xi1>
    %cst_25 = arith.constant 0.000000e+00 : f32
    %108 = vector.broadcast %cst_25 : f32 to vector<1x256xf32>
    %109 = arith.select %107, %56, %108 : vector<1x256xi1>, vector<1x256xf32>
    %110 = vector.broadcast %58 : vector<1x256xi32> to vector<16x256xi32>
    %111 = arith.cmpi eq, %93, %110 : vector<16x256xi32>
    %cst_26 = arith.constant 0.000000e+00 : f32
    %112 = vector.shape_cast %102 : vector<1x256xf32> to vector<1x256xf32>
    %113 = vector.broadcast %112 : vector<1x256xf32> to vector<16x256xf32>
    %114 = vector.broadcast %cst_26 : f32 to vector<16x256xf32>
    %115 = arith.select %111, %113, %114 : vector<16x256xi1>, vector<16x256xf32>
    %116 = vector.broadcast %62 : vector<1x256xi32> to vector<16x256xi32>
    %117 = arith.cmpi eq, %93, %116 : vector<16x256xi32>
    %cst_27 = arith.constant 0.000000e+00 : f32
    %118 = vector.shape_cast %109 : vector<1x256xf32> to vector<1x256xf32>
    %119 = vector.broadcast %118 : vector<1x256xf32> to vector<16x256xf32>
    %120 = vector.broadcast %cst_27 : f32 to vector<16x256xf32>
    %121 = arith.select %117, %119, %120 : vector<16x256xi1>, vector<16x256xf32>
    %122 = arith.addf %115, %121 : vector<16x256xf32>
    %c0_28 = arith.constant 0 : index
    %c0_29 = arith.constant 0 : index
    %c0_30 = arith.constant 0 : index
    %123 = vector.load %arg4[%c0_28, %c0_29, %c0_30] : memref<1x64x16xbf16, #tpu.memory_space<vmem>>, vector<1x64x16xbf16>
    %124 = vector.shape_cast %123 : vector<1x64x16xbf16> to vector<64x16xbf16>
    %125 = arith.truncf %92 : vector<16x256xf32> to vector<16x256xbf16>
    %cst_31 = arith.constant dense<0.000000e+00> : vector<64x256xf32>
    %126 = tpu.matmul %124, %125, %cst_31 {dimension_numbers = #tpu.dot_dimension_numbers<[1], [0], [0], [1], [0, 0, 1, 1], [], []>} : vector<64x16xbf16>, vector<16x256xbf16>, vector<64x256xf32> -> vector<64x256xf32>
    %127 = vector.shape_cast %126 : vector<64x256xf32> to vector<4x16x256xf32>
    %128 = vector.shape_cast %122 : vector<16x256xf32> to vector<1x16x256xf32>
    %129 = vector.broadcast %128 : vector<1x16x256xf32> to vector<4x16x256xf32>
    %130 = arith.mulf %127, %129 : vector<4x16x256xf32>
    %cst_32 = arith.constant dense<0.000000e+00> : vector<4x256xf32>
    %131 = vector.multi_reduction <add>, %130, %cst_32 [1] : vector<4x16x256xf32> to vector<4x256xf32>
    %c0_33 = arith.constant 0 : index
    %c0_34 = arith.constant 0 : index
    %c0_35 = arith.constant 0 : index
    %132 = vector.load %arg5[%c0_33, %c0_34, %c0_35] : memref<1x1x256xf32, #tpu.memory_space<vmem>>, vector<1x1x256xf32>
    %133 = vector.shape_cast %132 : vector<1x1x256xf32> to vector<1x256xf32>
    %134 = vector.broadcast %133 : vector<1x256xf32> to vector<4x256xf32>
    %135 = arith.mulf %131, %134 : vector<4x256xf32>
    %c0_36 = arith.constant 0 : index
    %c0_37 = arith.constant 0 : index
    %c0_38 = arith.constant 0 : index
    %136 = vector.load %arg6[%c0_36, %c0_37, %c0_38] : memref<1x4x256xf32, #tpu.memory_space<vmem>>, vector<1x4x256xf32>
    %137 = vector.shape_cast %136 : vector<1x4x256xf32> to vector<4x256xf32>
    %138 = vector.shape_cast %135 : vector<4x256xf32> to vector<1x4x256xf32>
    tpu.vector_store %arg6[%c0_36, %c0_37, %c0_38], %138 {strides = array<i32>} : memref<1x4x256xf32, #tpu.memory_space<vmem>>, vector<1x4x256xf32>,
    return
  }
  func.func @transform_0(%arg0: i32, %arg1: i32) -> i32 {
    %c0_i32 = arith.constant 0 : i32
    %c0_i32_0 = arith.constant 0 : i32
    return %c0_i32 : i32
  }
  func.func @transform_1(%arg0: i32, %arg1: i32) -> (i32, i32, i32) {
    %c0_i32 = arith.constant 0 : i32
    %c0_i32_0 = arith.constant 0 : i32
    return %arg0, %c0_i32, %arg1 : i32, i32, i32
  }
  func.func @transform_2(%arg0: i32, %arg1: i32) -> (i32, i32, i32) {
    %c0_i32 = arith.constant 0 : i32
    %c0_i32_0 = arith.constant 0 : i32
    %c0_i32_1 = arith.constant 0 : i32
    return %arg0, %c0_i32, %c0_i32_0 : i32, i32, i32
  }
  func.func @transform_3(%arg0: i32, %arg1: i32) -> (i32, i32, i32) {
    %c0_i32 = arith.constant 0 : i32
    %c0_i32_0 = arith.constant 0 : i32
    return %arg0, %c0_i32, %arg1 : i32, i32, i32
  }
  func.func @transform_4(%arg0: i32, %arg1: i32) -> (i32, i32, i32) {
    %c0_i32 = arith.constant 0 : i32
    %c0_i32_0 = arith.constant 0 : i32
    return %arg0, %c0_i32, %arg1 : i32, i32, i32
  }
}

</mosaic_0001>

<llo_original>
// kernel: tpu_custom_call.1
$region0: #{tpu_custom_call.1}
  #allocation0 [shape = 'u32[]', space=smem, size = 0x4, offset = 0x4, fixed_abs, tag = 'smem constant byte address 0x4 - core index']
  #allocation1 [shape = 'u32[144,128]{1,0:T(1,128)}', space=vmem, size = 0x12000, scoped, tag = 'internal scratch']
  %s0 = inlined_call_operand.vmem [shape: f32[12], index: 0, kind: input, shape index: {}]
  %s1 = inlined_call_operand.vmem [shape: f32[2,2,256], index: 1, kind: input, shape index: {}]
  %s2 = inlined_call_operand.vmem [shape: bf16[2,64,16], index: 2, kind: input, shape index: {}]
  %s3 = inlined_call_operand.vmem [shape: f32[2,1,256], index: 3, kind: input, shape index: {}]
  %s4 = inlined_call_operand.hbm [shape: f32[2,4,256], index: 4, kind: output, shape index: {}]
  %s5 = sld [smem:[#allocation0]]
  $region53: #{tpu_custom_call.1} parent=0
    _
  %s7 = ssub.s32 1, %s5
  %s8 = scalar_select 0, %s7, %s5
  $region1: #{tpu_custom_call.1} parent=0
    #allocation2 [shape = 'u8[512]{0}', space=smem, size = 0x200, scoped, tag = 'input window, operand 0, single buffered']
    #allocation3 [shape = 's32[2]{0}', space=sflag, size = 0x8, scoped, tag = 'scoped memory for tpu_custom_call.1']
    #allocation4 [shape = 's32[2]{0}', space=sflag, size = 0x8, scoped, tag = 'scoped memory for tpu_custom_call.1']
    #allocation5 [shape = 'u8[8192]{0}', space=vmem, size = 0x2000, scoped, tag = 'output window, operand 0']
    %9 = vsyncpa [#allocation4], 0
    %10 = vsyncpa [#allocation3], 0
    %s11 = scalar_lea.sflag [#allocation3], 1
    %12 = vsyncpa %s11, 0
    loop: start=0, step=1, limit=4
    $region2: #{tpu_custom_call.1} parent=1 // loop_pre_header
      _
    $region3: #{tpu_custom_call.1} parent=1 // loop_header
      %s14 = sphi 0, %s18
      %p15 = scmp.ge.s32.totalorder %s14, 4
      %s21 = sphi 0, %s33
      %s22 = sphi 0, %s29
      %s23 = sphi 0, %s21
      %s24 = sphi 0, %s22
      %s25 = sphi 0, %s23
      %s26 = sphi 0, %s24
      %s34 = sphi 0, %s34
      %s36 = sphi 0, %s34
      %s37 = sphi 0, %s36
      %s51 = sphi 0, %s37
      %s59 = sphi 0, %s61
      %s62 = sphi 0, %s59
      %s63 = sphi 0, %s62
      %s79 = sphi 0, %s63
      %s85 = sphi 0, %s87
      %s88 = sphi 0, %s85
      %s89 = sphi 0, %s88
      %s105 = sphi 0, %s89
      %s113 = sphi 0, %s115
      %s116 = sphi 0, %s113
      %s117 = sphi 0, %s116
      %s133 = sphi 0, %s117
      %s141 = sphi 0, %s143
      %s144 = sphi 0, %s141
      %s145 = sphi 0, %s144
      %s161 = sphi 0, %s145
    $region4: #{tpu_custom_call.1} parent=1 // loop_header_branch
      %17 = sbr.rel (%p15) target = $region8
    $region5: #{tpu_custom_call.1} parent=1 // loop_body
      %s19 = ssub.s32 %s14, 1
      %s20 = ssub.s32 %s14, 2
      %s27 = sadd.s32 1, %s22
      %p28 = scmp.ge.s32.totalorder %s27, 1
      %s29 = scalar_select %p28, 0, %s27
      %s30 = sadd.s32 1, %s21
      %s31 = scalar_select %p28, %s30, %s21
      %p32 = scmp.ge.s32.totalorder %s31, 2
      %s33 = scalar_select %p32, 0, %s31
      %s35 = sadd.s32 %s34, 1
      %p38 = scmp.eq.s32.totalorder %s14, 1
      %p39 = scmp.ne.s32.totalorder %s34, %s36
      %p40 = scmp.eq.s32.totalorder %s14, 0
      %p41 = por %p39, %p40
      %p42 = scmp.ne.s32.totalorder %s34, %s36
      %p43 = scmp.eq.s32.totalorder %s19, 1
      %p44 = por %p42, %p43
      %p45 = scmp.ne.s32.totalorder %s36, %s37
      %p46 = scmp.eq.s32.totalorder %s19, 0
      %p47 = por %p45, %p46
      %p48 = scmp.ne.s32.totalorder %s36, %s37
      %p49 = scmp.eq.s32.totalorder %s20, 1
      %p50 = por %p48, %p49
      %p52 = scmp.ne.s32.totalorder %s37, %s51
      %p53 = scmp.eq.s32.totalorder %s20, 0
      %p54 = por %p52, %p53
      %s55 = ssub.s32 %s21, %s33
      %s56 = ssub.s32 %s22, %s29
      %s57 = sor.u32 %s55, %s56
      %p58 = scmp.eq.s32.totalorder %s57, 0
      %s60 = sadd.s32 %s59, 1
      %s61 = scalar_select %p58, %s59, %s60
      %p64 = pneg %p58
      %p65 = scmp.eq.s32.totalorder %s14, 1
      %p66 = por %p64, %p65
      %p67 = scmp.ne.s32.totalorder %s59, %s62
      %p68 = scmp.eq.s32.totalorder %s14, 0
      %p69 = por %p67, %p68
      %p70 = scmp.ne.s32.totalorder %s59, %s62
      %p71 = scmp.eq.s32.totalorder %s19, 1
      %p72 = por %p70, %p71
      %p73 = scmp.ne.s32.totalorder %s62, %s63
      %p74 = scmp.eq.s32.totalorder %s19, 0
      %p75 = por %p73, %p74
      %p76 = scmp.ne.s32.totalorder %s62, %s63
      %p77 = scmp.eq.s32.totalorder %s20, 1
      %p78 = por %p76, %p77
      %p80 = scmp.ne.s32.totalorder %s63, %s79
      %p81 = scmp.eq.s32.totalorder %s20, 0
      %p82 = por %p80, %p81
      %s83 = ssub.s32 %s21, %s33
      %p84 = scmp.eq.s32.totalorder %s83, 0
      %s86 = sadd.s32 %s85, 1
      %s87 = scalar_select %p84, %s85, %s86
      %p90 = pneg %p84
      %p91 = scmp.eq.s32.totalorder %s14, 1
      %p92 = por %p90, %p91
      %p93 = scmp.ne.s32.totalorder %s85, %s88
      %p94 = scmp.eq.s32.totalorder %s14, 0
      %p95 = por %p93, %p94
      %p96 = scmp.ne.s32.totalorder %s85, %s88
      %p97 = scmp.eq.s32.totalorder %s19, 1
      %p98 = por %p96, %p97
      %p99 = scmp.ne.s32.totalorder %s88, %s89
      %p100 = scmp.eq.s32.totalorder %s19, 0
      %p101 = por %p99, %p100
      %p102 = scmp.ne.s32.totalorder %s88, %s89
      %p103 = scmp.eq.s32.totalorder %s20, 1
      %p104 = por %p102, %p103
      %p106 = scmp.ne.s32.totalorder %s89, %s105
      %p107 = scmp.eq.s32.totalorder %s20, 0
      %p108 = por %p106, %p107
      %s109 = ssub.s32 %s21, %s33
      %s110 = ssub.s32 %s22, %s29
      %s111 = sor.u32 %s109, %s110
      %p112 = scmp.eq.s32.totalorder %s111, 0
      %s114 = sadd.s32 %s113, 1
      %s115 = scalar_select %p112, %s113, %s114
      %p118 = pneg %p112
      %p119 = scmp.eq.s32.totalorder %s14, 1
      %p120 = por %p118, %p119
      %p121 = scmp.ne.s32.totalorder %s113, %s116
      %p122 = scmp.eq.s32.totalorder %s14, 0
      %p123 = por %p121, %p122
      %p124 = scmp.ne.s32.totalorder %s113, %s116
      %p125 = scmp.eq.s32.totalorder %s19, 1
      %p126 = por %p124, %p125
      %p127 = scmp.ne.s32.totalorder %s116, %s117
      %p128 = scmp.eq.s32.totalorder %s19, 0
      %p129 = por %p127, %p128
      %p130 = scmp.ne.s32.totalorder %s116, %s117
      %p131 = scmp.eq.s32.totalorder %s20, 1
      %p132 = por %p130, %p131
      %p134 = scmp.ne.s32.totalorder %s117, %s133
      %p135 = scmp.eq.s32.totalorder %s20, 0
      %p136 = por %p134, %p135
      %s137 = ssub.s32 %s21, %s33
      %s138 = ssub.s32 %s22, %s29
      %s139 = sor.u32 %s137, %s138
      %p140 = scmp.eq.s32.totalorder %s139, 0
      %s142 = sadd.s32 %s141, 1
      %s143 = scalar_select %p140, %s141, %s142
      %p146 = pneg %p140
      %p147 = scmp.eq.s32.totalorder %s14, 1
      %p148 = por %p146, %p147
      %p149 = scmp.ne.s32.totalorder %s141, %s144
      %p150 = scmp.eq.s32.totalorder %s14, 0
      %p151 = por %p149, %p150
      %p152 = scmp.ne.s32.totalorder %s141, %s144
      %p153 = scmp.eq.s32.totalorder %s19, 1
      %p154 = por %p152, %p153
      %p155 = scmp.ne.s32.totalorder %s144, %s145
      %p156 = scmp.eq.s32.totalorder %s19, 0
      %p157 = por %p155, %p156
      %p158 = scmp.ne.s32.totalorder %s144, %s145
      %p159 = scmp.eq.s32.totalorder %s20, 1
      %p160 = por %p158, %p159
      %p162 = scmp.ne.s32.totalorder %s145, %s161
      %p163 = scmp.eq.s32.totalorder %s20, 0
      %p164 = por %p162, %p163
      %p165 = scmp.le.s32.totalorder 1, %s14
      %p166 = scmp.lt.s32.totalorder %s14, 3
      %p167 = pnand %p165, %p166
      %p168 = pneg %p167
      // Predicated region
      $region9: #{tpu_custom_call.1} parent=5 // pred_check
        _
      $region10: #{tpu_custom_call.1} parent=5 // pred_check_branch
        %170 = sbr.rel (%p167) target = $region12
      $region11: #{tpu_custom_call.1} parent=5 // pred_region
        %s171 = ssub.s32 %s14, 1
        // Predicated region
        $region13: #{tpu_custom_call.1} parent=11 // pred_check
          %p172 = pneg %p47
        $region14: #{tpu_custom_call.1} parent=11 // pred_check_branch
          %174 = sbr.rel (%p172) target = $region16
        $region15: #{tpu_custom_call.1} parent=11 // pred_region
          %s176 = ssub.s32 16, 16
          %177 = vsyncadd [#allocation4], %s176
          %s179 = sshll.u32 %s0, 4
          %s180 = int_to_ptr.vmem [resolvable:$true] %s179
          %182 = dma.vmem_to_smem %s180, 16, [#allocation2], [#allocation4]
        $region16: #{tpu_custom_call.1} parent=11 // pred_fallthru
          _
      $region12: #{tpu_custom_call.1} parent=5 // pred_fallthru
        _
      %p183 = scmp.lt.s32.totalorder %s14, 2
      // Predicated region
      $region17: #{tpu_custom_call.1} parent=5 // pred_check
        %p184 = pneg %p183
      $region18: #{tpu_custom_call.1} parent=5 // pred_check_branch
        %186 = sbr.rel (%p184) target = $region20
      $region19: #{tpu_custom_call.1} parent=5 // pred_region
        // Predicated region
        $region21: #{tpu_custom_call.1} parent=19 // pred_check
          %p187 = pneg %p69
        $region22: #{tpu_custom_call.1} parent=19 // pred_check_branch
          %189 = sbr.rel (%p187) target = $region24
        $region23: #{tpu_custom_call.1} parent=19 // pred_region
          %s190 = smul.u32 2, %s22
          %p191 = scmp.lt.s32.totalorder %s21, 1
          %s192 = scalar_select %p191, %s21, 1
          %p193 = scmp.lt.s32.totalorder %s190, 1
          %s194 = scalar_select %p193, %s190, 1
          %s195 = smul.addr %s192, 2
          %s196 = sadd.s32 %s194, %s195
          %s197 = smul.addr %s196, 2
          %s198 = scalar_lea.vmem %s1, %s197
          %s199 = smul.u32 2, %s22
        $region24: #{tpu_custom_call.1} parent=19 // pred_fallthru
          _
        // Predicated region
        $region25: #{tpu_custom_call.1} parent=19 // pred_check
          %p200 = pneg %p95
        $region26: #{tpu_custom_call.1} parent=19 // pred_check_branch
          %202 = sbr.rel (%p200) target = $region28
        $region27: #{tpu_custom_call.1} parent=19 // pred_region
          %p203 = scmp.lt.s32.totalorder %s21, 1
          %s204 = scalar_select %p203, %s21, 1
          %s205 = smul.addr %s204, 8
          %s206 = smul.addr %s205, 4
          %s207 = scalar_lea.vmem %s2, %s206
        $region28: #{tpu_custom_call.1} parent=19 // pred_fallthru
          _
        // Predicated region
        $region29: #{tpu_custom_call.1} parent=19 // pred_check
          %p208 = pneg %p123
        $region30: #{tpu_custom_call.1} parent=19 // pred_check_branch
          %210 = sbr.rel (%p208) target = $region32
        $region31: #{tpu_custom_call.1} parent=19 // pred_region
          %s211 = smul.u32 2, %s22
          %p212 = scmp.lt.s32.totalorder %s21, 1
          %s213 = scalar_select %p212, %s21, 1
          %p214 = scmp.lt.s32.totalorder %s211, 1
          %s215 = scalar_select %p214, %s211, 1
          %s216 = smul.addr %s213, 2
          %s217 = sadd.s32 %s215, %s216
          %s218 = scalar_lea.vmem %s3, %s217
          %s219 = smul.u32 2, %s22
        $region32: #{tpu_custom_call.1} parent=19 // pred_fallthru
          _
      $region20: #{tpu_custom_call.1} parent=5 // pred_fallthru
        _
      %p220 = scmp.le.s32.totalorder 1, %s14
      %p221 = scmp.lt.s32.totalorder %s14, 3
      %p222 = pnand %p220, %p221
      %p223 = pneg %p222
      // Predicated region
      $region33: #{tpu_custom_call.1} parent=5 // pred_check
        _
      $region34: #{tpu_custom_call.1} parent=5 // pred_check_branch
        %225 = sbr.rel (%p222) target = $region36
      $region35: #{tpu_custom_call.1} parent=5 // pred_region
        %s226 = ssub.s32 %s14, 1
        // Predicated region
        $region37: #{tpu_custom_call.1} parent=35 // pred_check
          %p227 = pneg %p47
        $region38: #{tpu_custom_call.1} parent=35 // pred_check_branch
          %229 = sbr.rel (%p227) target = $region40
        $region39: #{tpu_custom_call.1} parent=35 // pred_region
          %230 = dma.done [#allocation4], 16
        $region40: #{tpu_custom_call.1} parent=35 // pred_fallthru
          _
        %231 = sfence
        %p232 = pneg %p47
        %p233 = pneg %p44
        %s234 = smul.u32 2, %s24
        %p235 = scmp.lt.s32.totalorder %s23, 1
        %s236 = scalar_select %p235, %s23, 1
        %p237 = scmp.lt.s32.totalorder %s234, 1
        %s238 = scalar_select %p237, %s234, 1
        %s239 = smul.addr %s236, 2
        %s240 = sadd.s32 %s238, %s239
        %s241 = smul.addr %s240, 2
        %s242 = scalar_lea.vmem %s1, %s241
        %p243 = pneg %p75
        %p244 = pneg %p72
        %p245 = scmp.lt.s32.totalorder %s23, 1
        %s246 = scalar_select %p245, %s23, 1
        %s247 = smul.addr %s246, 8
        %s248 = smul.addr %s247, 4
        %s249 = scalar_lea.vmem %s2, %s248
        %p250 = pneg %p101
        %p251 = pneg %p98
        %s252 = smul.u32 2, %s24
        %p253 = scmp.lt.s32.totalorder %s23, 1
        %s254 = scalar_select %p253, %s23, 1
        %p255 = scmp.lt.s32.totalorder %s252, 1
        %s256 = scalar_select %p255, %s252, 1
        %s257 = smul.addr %s254, 2
        %s258 = sadd.s32 %s256, %s257
        %s259 = scalar_lea.vmem %s3, %s258
        %p260 = pneg %p129
        %p261 = pneg %p126
        %p262 = pneg %p157
        %p263 = pneg %p154
        %s264 = sand.u32 %s144, 1
        %s265 = scalar_lea.sflag [#allocation3], %s264
        %s266 = sand.u32 %s144, 1
        %s267 = smul.addr %s266, 8
        %s268 = scalar_lea.vmem [#allocation5], %s267
        %s269 = smul.u32 2, %s24
        %p270 = scmp.lt.s32.totalorder %s23, 1
        %s271 = scalar_select %p270, %s23, 1
        %p272 = scmp.lt.s32.totalorder %s269, 1
        %s273 = scalar_select %p272, %s269, 1
        %s274 = smul.addr %s271, 2
        %s275 = sadd.s32 %s273, %s274
        %s276 = smul.addr %s275, 2
        %s277 = scalar_lea.vmem %s1, %s276
        %s278 = smul.u32 2, %s24
        %p279 = scmp.lt.s32.totalorder %s23, 1
        %s280 = scalar_select %p279, %s23, 1
        %s281 = smul.addr %s280, 8
        %s282 = smul.addr %s281, 4
        %s283 = scalar_lea.vmem %s2, %s282
        %s284 = smul.u32 2, %s24
        %p285 = scmp.lt.s32.totalorder %s23, 1
        %s286 = scalar_select %p285, %s23, 1
        %p287 = scmp.lt.s32.totalorder %s284, 1
        %s288 = scalar_select %p287, %s284, 1
        %s289 = smul.addr %s286, 2
        %s290 = sadd.s32 %s288, %s289
        %s291 = scalar_lea.vmem %s3, %s290
        %s292 = smul.u32 2, %s24
        %s293 = smul.u32 2, %s24
        %s295 = smul.u32 %s23, 6
        %s296 = sld [smem:[#allocation2 + %s295]]
        %s297 = sadd.s32 %s295, 1
        %s298 = sld [smem:[#allocation2 + %s297]]
        %s299 = sadd.s32 %s295, 2
        %s300 = sld [smem:[#allocation2 + %s299]]
        %s301 = sadd.s32 %s295, 3
        %s302 = sld [smem:[#allocation2 + %s301]]
        %s303 = sadd.s32 %s295, 4
        %s304 = sld [smem:[#allocation2 + %s303]]
        %s305 = sadd.s32 %s295, 5
        %s306 = sld [smem:[#allocation2 + %s305]]
        %v307 = vld [vmem:[%s277] sm:$0xf]
        %v308 = vstv %s296
        %v309 = vmul.f32 %v308, %v307
        %v310 = vstv %s298
        %v311 = vmul.f32 %v310, %v307
        %v313 = vrot.slane %v311, 7
        %v314 = vrot.slane %v313, 2
        %v316 = vadd.f32 %v309, %v314
        %v317 = vstv %s300
        %v318 = vadd.f32 %v316, %v317
        %v319 = vstv %s302
        %v320 = vmul.f32 %v319, %v307
        %v321 = vstv %s304
        %v322 = vmul.f32 %v321, %v307
        %v324 = vrot.slane %v322, 7
        %v325 = vrot.slane %v324, 2
        %v327 = vadd.f32 %v320, %v325
        %v328 = vstv %s306
        %v329 = vadd.f32 %v327, %v328
        %v330 = vadd.f32 %v318, 1.0
        %v331 = vmul.f32 %v330, 16.0
        %v332 = vsub.f32 %v331, 1.0
        %v333 = vmul.f32 %v332, 0.5
        %v334 = vadd.f32 %v329, 1.0
        %v335 = vmul.f32 %v334, 16.0
        %v336 = vsub.f32 %v335, 1.0
        %v337 = vmul.f32 %v336, 0.5
        %v338 = vfloor.f32 %v333
        %v339 = vfloor.f32 %v337
        %v340 = vsub.f32 %v333, %v338
        %v341 = vsub.f32 %v337, %v339
        %v342 = vcvt.f32.s32.to.zero.pseudo %v338
        %v343 = vcvt.f32.s32.to.zero.pseudo %v339
        %v344 = vadd.s32 %v342, 1
        %v345 = vadd.s32 %v343, 1
        %v346 = vlaneseq
        %v347 = vshrl.u32 %v346, 7
        %v348 = vadd.s32 %v347, 8
        %vm349 = vcmp.ge.s32.totalorder %v342, 0
        %vm350 = vcmp.lt.s32.totalorder %v342, 16
        %vm351 = vmand %vm349, %vm350
        %v352 = vsub.f32 1.0, %v340
        %v353 = vsel %vm351, %v352, 0.0
        %vm354 = vcmp.ge.s32.totalorder %v344, 0
        %vm355 = vcmp.lt.s32.totalorder %v344, 16
        %vm356 = vmand %vm354, %vm355
        %v357 = vsel %vm356, %v340, 0.0
        %v358 = vlaneseq
        %v359 = vshrl.u32 %v358, 7
        %v360 = vsub.s32 0, %v359
        %v361 = vrot.slane %v342, %v360
        %v362 = vlaneseq
        %v363 = vshrl.u32 %v362, 7
        %v364 = vsub.s32 2, %v363
        %v365 = vrot.slane %v342, %v364
        %v366 = vlaneseq
        %v367 = vshrl.u32 %v366, 7
        %v368 = vsub.s32 0, %v367
        %v369 = vrot.slane %v361, %v368
        %v370 = vlaneseq
        %v371 = vshrl.u32 %v370, 7
        %v372 = vsub.s32 0, %v371
        %v373 = vrot.slane %v365, %v372
        %vm374 = vcmp.eq.s32.totalorder %v347, %v369
        %vm375 = vcmp.eq.s32.totalorder %v347, %v373
        %vm376 = vcmp.eq.s32.totalorder %v348, %v369
        %vm377 = vcmp.eq.s32.totalorder %v348, %v373
        %v379 = vlaneseq
        %v380 = vshrl.u32 %v379, 7
        %v381 = vsub.s32 0, %v380
        %v382 = vrot.slane %v353, %v381
        %v383 = vlaneseq
        %v384 = vshrl.u32 %v383, 7
        %v385 = vsub.s32 2, %v384
        %v386 = vrot.slane %v353, %v385
        %v389 = vlaneseq
        %v390 = vshrl.u32 %v389, 7
        %v391 = vsub.s32 0, %v390
        %v392 = vrot.slane %v382, %v391
        %v393 = vlaneseq
        %v394 = vshrl.u32 %v393, 7
        %v395 = vsub.s32 0, %v394
        %v396 = vrot.slane %v386, %v395
        %v397 = vsel %vm374, %v392, 0.0
        %v398 = vsel %vm375, %v396, 0.0
        %v399 = vsel %vm376, %v392, 0.0
        %v400 = vsel %vm377, %v396, 0.0
        %v401 = vlaneseq
        %v402 = vshrl.u32 %v401, 7
        %v403 = vsub.s32 0, %v402
        %v404 = vrot.slane %v344, %v403
        %v405 = vlaneseq
        %v406 = vshrl.u32 %v405, 7
        %v407 = vsub.s32 2, %v406
        %v408 = vrot.slane %v344, %v407
        %v409 = vlaneseq
        %v410 = vshrl.u32 %v409, 7
        %v411 = vsub.s32 0, %v410
        %v412 = vrot.slane %v404, %v411
        %v413 = vlaneseq
        %v414 = vshrl.u32 %v413, 7
        %v415 = vsub.s32 0, %v414
        %v416 = vrot.slane %v408, %v415
        %vm417 = vcmp.eq.s32.totalorder %v347, %v412
        %vm418 = vcmp.eq.s32.totalorder %v347, %v416
        %vm419 = vcmp.eq.s32.totalorder %v348, %v412
        %vm420 = vcmp.eq.s32.totalorder %v348, %v416
        %v422 = vlaneseq
        %v423 = vshrl.u32 %v422, 7
        %v424 = vsub.s32 0, %v423
        %v425 = vrot.slane %v357, %v424
        %v426 = vlaneseq
        %v427 = vshrl.u32 %v426, 7
        %v428 = vsub.s32 2, %v427
        %v429 = vrot.slane %v357, %v428
        %v432 = vlaneseq
        %v433 = vshrl.u32 %v432, 7
        %v434 = vsub.s32 0, %v433
        %v435 = vrot.slane %v425, %v434
        %v436 = vlaneseq
        %v437 = vshrl.u32 %v436, 7
        %v438 = vsub.s32 0, %v437
        %v439 = vrot.slane %v429, %v438
        %v440 = vsel %vm417, %v435, 0.0
        %v441 = vsel %vm418, %v439, 0.0
        %v442 = vsel %vm419, %v435, 0.0
        %v443 = vsel %vm420, %v439, 0.0
        %v444 = vadd.f32 %v397, %v440
        %v445 = vadd.f32 %v398, %v441
        %v446 = vadd.f32 %v399, %v442
        %v447 = vadd.f32 %v400, %v443
        %vm448 = vcmp.ge.s32.totalorder %v343, 0
        %vm449 = vcmp.lt.s32.totalorder %v343, 16
        %vm450 = vmand %vm448, %vm449
        %v451 = vsub.f32 1.0, %v341
        %v452 = vsel %vm450, %v451, 0.0
        %vm453 = vcmp.ge.s32.totalorder %v345, 0
        %vm454 = vcmp.lt.s32.totalorder %v345, 16
        %vm455 = vmand %vm453, %vm454
        %v456 = vsel %vm455, %v341, 0.0
        %v457 = vlaneseq
        %v458 = vshrl.u32 %v457, 7
        %v459 = vsub.s32 0, %v458
        %v460 = vrot.slane %v343, %v459
        %v461 = vlaneseq
        %v462 = vshrl.u32 %v461, 7
        %v463 = vsub.s32 2, %v462
        %v464 = vrot.slane %v343, %v463
        %v465 = vlaneseq
        %v466 = vshrl.u32 %v465, 7
        %v467 = vsub.s32 0, %v466
        %v468 = vrot.slane %v460, %v467
        %v469 = vlaneseq
        %v470 = vshrl.u32 %v469, 7
        %v471 = vsub.s32 0, %v470
        %v472 = vrot.slane %v464, %v471
        %vm473 = vcmp.eq.s32.totalorder %v347, %v468
        %vm474 = vcmp.eq.s32.totalorder %v347, %v472
        %vm475 = vcmp.eq.s32.totalorder %v348, %v468
        %vm476 = vcmp.eq.s32.totalorder %v348, %v472
        %v478 = vlaneseq
        %v479 = vshrl.u32 %v478, 7
        %v480 = vsub.s32 0, %v479
        %v481 = vrot.slane %v452, %v480
        %v482 = vlaneseq
        %v483 = vshrl.u32 %v482, 7
        %v484 = vsub.s32 2, %v483
        %v485 = vrot.slane %v452, %v484
        %v488 = vlaneseq
        %v489 = vshrl.u32 %v488, 7
        %v490 = vsub.s32 0, %v489
        %v491 = vrot.slane %v481, %v490
        %v492 = vlaneseq
        %v493 = vshrl.u32 %v492, 7
        %v494 = vsub.s32 0, %v493
        %v495 = vrot.slane %v485, %v494
        %v496 = vsel %vm473, %v491, 0.0
        %v497 = vsel %vm474, %v495, 0.0
        %v498 = vsel %vm475, %v491, 0.0
        %v499 = vsel %vm476, %v495, 0.0
        %v500 = vlaneseq
        %v501 = vshrl.u32 %v500, 7
        %v502 = vsub.s32 0, %v501
        %v503 = vrot.slane %v345, %v502
        %v504 = vlaneseq
        %v505 = vshrl.u32 %v504, 7
        %v506 = vsub.s32 2, %v505
        %v507 = vrot.slane %v345, %v506
        %v508 = vlaneseq
        %v509 = vshrl.u32 %v508, 7
        %v510 = vsub.s32 0, %v509
        %v511 = vrot.slane %v503, %v510
        %v512 = vlaneseq
        %v513 = vshrl.u32 %v512, 7
        %v514 = vsub.s32 0, %v513
        %v515 = vrot.slane %v507, %v514
        %vm516 = vcmp.eq.s32.totalorder %v347, %v511
        %vm517 = vcmp.eq.s32.totalorder %v347, %v515
        %vm518 = vcmp.eq.s32.totalorder %v348, %v511
        %vm519 = vcmp.eq.s32.totalorder %v348, %v515
        %v521 = vlaneseq
        %v522 = vshrl.u32 %v521, 7
        %v523 = vsub.s32 0, %v522
        %v524 = vrot.slane %v456, %v523
        %v525 = vlaneseq
        %v526 = vshrl.u32 %v525, 7
        %v527 = vsub.s32 2, %v526
        %v528 = vrot.slane %v456, %v527
        %v531 = vlaneseq
        %v532 = vshrl.u32 %v531, 7
        %v533 = vsub.s32 0, %v532
        %v534 = vrot.slane %v524, %v533
        %v535 = vlaneseq
        %v536 = vshrl.u32 %v535, 7
        %v537 = vsub.s32 0, %v536
        %v538 = vrot.slane %v528, %v537
        %v539 = vsel %vm516, %v534, 0.0
        %v540 = vsel %vm517, %v538, 0.0
        %v541 = vsel %vm518, %v534, 0.0
        %v542 = vsel %vm519, %v538, 0.0
        %v543 = vadd.f32 %v496, %v539
        %v544 = vadd.f32 %v497, %v540
        %v545 = vadd.f32 %v498, %v541
        %v546 = vadd.f32 %v499, %v542
        %v547 = vld [vmem:[%s283] sm:$0xf]
        %v548 = vld [vmem:[%s283 + $0x4] sm:$0xf]
        %v549 = vld [vmem:[%s283 + $0x8] sm:$0xf]
        %v550 = vld [vmem:[%s283 + $0xc] sm:$0xf]
        %v551 = vld [vmem:[%s283 + $0x10] sm:$0xf]
        %v552 = vld [vmem:[%s283 + $0x14] sm:$0xf]
        %v553 = vld [vmem:[%s283 + $0x18] sm:$0xf]
        %v554 = vld [vmem:[%s283 + $0x1c] sm:$0xf]
        %v555 = vpack.c.bf16 %v446, %v444
        %v556 = vpack.c.bf16 %v447, %v445
        %v565 = vunpack.c.l.b16 %v547
        %v566 = vunpack.c.l.b16 %v548
        %v567 = vunpack.c.l.b16 %v549
        %v568 = vunpack.c.l.b16 %v550
        %v569 = vunpack.c.l.b16 %v551
        %v570 = vunpack.c.l.b16 %v552
        %v571 = vunpack.c.l.b16 %v553
        %v572 = vunpack.c.l.b16 %v554
        %v573 = vpack.c.b16 %v566, %v565
        %v574 = vpack.c.b16 %v568, %v567
        %v575 = vpack.c.b16 %v570, %v569
        %v576 = vpack.c.b16 %v572, %v571
        %vm577 = vcmask 130048
        %v579 = vsel %vm577, %v573, 0
        %v582 = vsel %vm577, %v574, 0
        %v585 = vsel %vm577, %v575, 0
        %v588 = vsel %vm577, %v576, 0
        %590 = vmatprep.subr.bf16.mxu0 %v556
        %591 = vmatpush1.bf16.msra.mxu0 %v555
        %592 = vmatprep.subr.bf16.mxu0 0
        %593 = vmatpush1.bf16.msra.mxu0 0
        %594 = vmatprep.subr.bf16.mxu0 0
        %595 = vmatpush1.bf16.msra.mxu0 0
        %596 = vmatprep.subr.bf16.mxu0 0
        %597 = vmatpush1.bf16.msra.mxu0 0
        %598 = vmatprep.subr.bf16.mxu0 0
        %599 = vmatpush1.bf16.msra.mxu0 0
        %600 = vmatprep.subr.bf16.mxu0 0
        %601 = vmatpush1.bf16.msra.mxu0 0
        %602 = vmatprep.subr.bf16.mxu0 0
        %603 = vmatpush1.bf16.msra.mxu0 0
        %604 = vmatprep.subr.bf16.mxu0 0
        %605 = vmatpush1.bf16.msra.mxu0 0
        %606 = vmatprep.subr.bf16.mxu0 0
        %607 = vmatpush1.bf16.msra.mxu0 0
        %608 = vmatprep.subr.bf16.mxu0 0
        %609 = vmatpush1.bf16.msra.mxu0 0
        %610 = vmatprep.subr.bf16.mxu0 0
        %611 = vmatpush1.bf16.msra.mxu0 0
        %612 = vmatprep.subr.bf16.mxu0 0
        %613 = vmatpush1.bf16.msra.mxu0 0
        %614 = vmatprep.subr.bf16.mxu0 0
        %615 = vmatpush1.bf16.msra.mxu0 0
        %616 = vmatprep.subr.bf16.mxu0 0
        %617 = vmatpush1.bf16.msra.mxu0 0
        %618 = vmatprep.subr.bf16.mxu0 0
        %619 = vmatpush1.bf16.msra.mxu0 0
        %620 = vmatprep.subr.bf16.mxu0 0
        %621 = vmatpush1.bf16.msra.mxu0 0
        %622 = vmatprep.mubr.bf16.mxu0 0
        %623 = vmatmul.mubr.bf16.gmra.mrb[0].mxu0 %v579
        %v624 = vpop.f32.mrb[0].mxu0
        %v625 = vadd.f32 0.0, %v624
        %v626 = vpop.f32.mrb[0].mxu0
        %v627 = vadd.f32 0.0, %v626
        %v628 = vpop.f32.mrb[0].mxu0
        %v629 = vadd.f32 0.0, %v628
        %v630 = vpop.f32.mrb[0].mxu0
        %v631 = vadd.f32 0.0, %v630
        %632 = vmatprep.mubr.bf16.mxu0 0
        %633 = vmatmul.mubr.bf16.gmra.mrb[0].mxu0 %v582
        %v634 = vpop.f32.mrb[0].mxu0
        %v635 = vadd.f32 0.0, %v634
        %v636 = vpop.f32.mrb[0].mxu0
        %v637 = vadd.f32 0.0, %v636
        %v638 = vpop.f32.mrb[0].mxu0
        %v639 = vadd.f32 0.0, %v638
        %v640 = vpop.f32.mrb[0].mxu0
        %v641 = vadd.f32 0.0, %v640
        %642 = vmatprep.mubr.bf16.mxu0 0
        %643 = vmatmul.mubr.bf16.gmra.mrb[0].mxu0 %v585
        %v644 = vpop.f32.mrb[0].mxu0
        %v645 = vadd.f32 0.0, %v644
        %v646 = vpop.f32.mrb[0].mxu0
        %v647 = vadd.f32 0.0, %v646
        %v648 = vpop.f32.mrb[0].mxu0
        %v649 = vadd.f32 0.0, %v648
        %v650 = vpop.f32.mrb[0].mxu0
        %v651 = vadd.f32 0.0, %v650
        %652 = vmatprep.mubr.bf16.mxu0 0
        %653 = vmatmul.mubr.bf16.gmra.mrb[0].mxu0 %v588
        %v654 = vpop.f32.mrb[0].mxu0
        %v655 = vadd.f32 0.0, %v654
        %v656 = vpop.f32.mrb[0].mxu0
        %v657 = vadd.f32 0.0, %v656
        %v658 = vpop.f32.mrb[0].mxu0
        %v659 = vadd.f32 0.0, %v658
        %v660 = vpop.f32.mrb[0].mxu0
        %v661 = vadd.f32 0.0, %v660
        %662 = vdwg.mxu0
        %v663 = vmul.f32 %v625, %v543
        %v664 = vmul.f32 %v627, %v544
        %v665 = vmul.f32 %v629, %v545
        %v666 = vmul.f32 %v631, %v546
        %v667 = vmul.f32 %v635, %v543
        %v668 = vmul.f32 %v637, %v544
        %v669 = vmul.f32 %v639, %v545
        %v670 = vmul.f32 %v641, %v546
        %v671 = vmul.f32 %v645, %v543
        %v672 = vmul.f32 %v647, %v544
        %v673 = vmul.f32 %v649, %v545
        %v674 = vmul.f32 %v651, %v546
        %v675 = vmul.f32 %v655, %v543
        %v676 = vmul.f32 %v657, %v544
        %v677 = vmul.f32 %v659, %v545
        %v678 = vmul.f32 %v661, %v546
        %v679 = vadd.f32 %v663, %v665
        %v680 = vrot.slane %v679, 4
        %v681 = vadd.f32 %v679, %v680
        %v682 = vrot.slane %v681, 2
        %v683 = vadd.f32 %v681, %v682
        %v684 = vrot.slane %v683, 1
        %v685 = vadd.f32 %v683, %v684
        %v686 = vadd.f32 %v664, %v666
        %v687 = vrot.slane %v686, 4
        %v688 = vadd.f32 %v686, %v687
        %v689 = vrot.slane %v688, 2
        %v690 = vadd.f32 %v688, %v689
        %v691 = vrot.slane %v690, 1
        %v692 = vadd.f32 %v690, %v691
        %v693 = vadd.f32 %v667, %v669
        %v694 = vrot.slane %v693, 4
        %v695 = vadd.f32 %v693, %v694
        %v696 = vrot.slane %v695, 2
        %v697 = vadd.f32 %v695, %v696
        %v698 = vrot.slane %v697, 1
        %v699 = vadd.f32 %v697, %v698
        %v700 = vadd.f32 %v668, %v670
        %v701 = vrot.slane %v700, 4
        %v702 = vadd.f32 %v700, %v701
        %v703 = vrot.slane %v702, 2
        %v704 = vadd.f32 %v702, %v703
        %v705 = vrot.slane %v704, 1
        %v706 = vadd.f32 %v704, %v705
        %v707 = vadd.f32 %v671, %v673
        %v708 = vrot.slane %v707, 4
        %v709 = vadd.f32 %v707, %v708
        %v710 = vrot.slane %v709, 2
        %v711 = vadd.f32 %v709, %v710
        %v712 = vrot.slane %v711, 1
        %v713 = vadd.f32 %v711, %v712
        %v714 = vadd.f32 %v672, %v674
        %v715 = vrot.slane %v714, 4
        %v716 = vadd.f32 %v714, %v715
        %v717 = vrot.slane %v716, 2
        %v718 = vadd.f32 %v716, %v717
        %v719 = vrot.slane %v718, 1
        %v720 = vadd.f32 %v718, %v719
        %v721 = vadd.f32 %v675, %v677
        %v722 = vrot.slane %v721, 4
        %v723 = vadd.f32 %v721, %v722
        %v724 = vrot.slane %v723, 2
        %v725 = vadd.f32 %v723, %v724
        %v726 = vrot.slane %v725, 1
        %v727 = vadd.f32 %v725, %v726
        %v728 = vadd.f32 %v676, %v678
        %v729 = vrot.slane %v728, 4
        %v730 = vadd.f32 %v728, %v729
        %v731 = vrot.slane %v730, 2
        %v732 = vadd.f32 %v730, %v731
        %v733 = vrot.slane %v732, 1
        %v734 = vadd.f32 %v732, %v733
        %v735 = vld [vmem:[%s291] sm:$0x3]
        %v737 = vlaneseq
        %v738 = vshrl.u32 %v737, 7
        %v739 = vsub.s32 0, %v738
        %v740 = vrot.slane %v735, %v739
        %v741 = vlaneseq
        %v742 = vshrl.u32 %v741, 7
        %v743 = vsub.s32 1, %v742
        %v744 = vrot.slane %v735, %v743
        %v747 = vmul.f32 %v685, %v740
        %v748 = vmul.f32 %v692, %v744
        %v749 = vmul.f32 %v699, %v740
        %v750 = vmul.f32 %v706, %v744
        %v751 = vmul.f32 %v713, %v740
        %v752 = vmul.f32 %v720, %v744
        %v753 = vmul.f32 %v727, %v740
        %v754 = vmul.f32 %v734, %v744
        %v763 = vcombine.low %v747, %v748
        %v764 = vcombine.low %v749, %v750
        %v765 = vcombine.low %v751, %v752
        %v766 = vcombine.low %v753, %v754
        %v767 = vrot.slane %v764, 7
        %vm768 = vcmask 1041409
        %v769 = vsel %vm768, %v767, %v763
        %vm770 = vcmask 1045509
        %v771 = vsel %vm770, %v767, %v769
        %v772 = vrot.slane %v765, 6
        %vm773 = vcmask 1042434
        %v774 = vsel %vm773, %v772, %v771
        %vm775 = vcmask 1046534
        %v776 = vsel %vm775, %v772, %v774
        %v777 = vrot.slane %v766, 5
        %vm778 = vcmask 1043459
        %v779 = vsel %vm778, %v777, %v776
        %vm780 = vcmask 1047559
        %v781 = vsel %vm780, %v777, %v779
        %783 = vst [vmem:[%s268] sm:$0xff] %v781
        %s784 = sand.u32 %s144, 1
        %s785 = scalar_lea.sflag [#allocation3], %s784
        %s786 = sand.u32 %s144, 1
        %s787 = smul.addr %s786, 8
        %s788 = scalar_lea.vmem [#allocation5], %s787
        // Predicated region
        $region41: #{tpu_custom_call.1} parent=35 // pred_check
          %p789 = pneg %p154
        $region42: #{tpu_custom_call.1} parent=35 // pred_check_branch
          %791 = sbr.rel (%p789) target = $region44
        $region43: #{tpu_custom_call.1} parent=35 // pred_region
          %s792 = smul.u32 2, %s24
          %s794 = ssub.s32 128, 128
          %795 = vsyncadd %s785, %s794
          %s796 = smul.addr %s23, 2
          %s797 = sadd.s32 %s792, %s796
          %s798 = smul.addr %s797, 64
          %s799 = scalar_lea.hbm %s4, %s798
          %s801 = sshll.u32 %s788, 4
          %s802 = int_to_ptr.vmem [resolvable:$true] %s801
          %804 = dma.vmem_to_hbm [thread:$0]  %s802, 128, %s799, %s785
        $region44: #{tpu_custom_call.1} parent=35 // pred_fallthru
          _
      $region36: #{tpu_custom_call.1} parent=5 // pred_fallthru
        _
      %p805 = scmp.le.s32.totalorder 2, %s14
      // Predicated region
      $region45: #{tpu_custom_call.1} parent=5 // pred_check
        %p806 = pneg %p805
      $region46: #{tpu_custom_call.1} parent=5 // pred_check_branch
        %808 = sbr.rel (%p806) target = $region48
      $region47: #{tpu_custom_call.1} parent=5 // pred_region
        %s809 = ssub.s32 %s14, 2
        // Predicated region
        $region49: #{tpu_custom_call.1} parent=47 // pred_check
          %p810 = pneg %p160
        $region50: #{tpu_custom_call.1} parent=47 // pred_check_branch
          %812 = sbr.rel (%p810) target = $region52
        $region51: #{tpu_custom_call.1} parent=47 // pred_region
          %s813 = sand.u32 %s145, 1
          %s814 = scalar_lea.sflag [#allocation3], %s813
          %s815 = sand.u32 %s145, 1
          %s816 = smul.addr %s815, 8
          %s817 = scalar_lea.vmem [#allocation5], %s816
          %818 = dma.done %s814, 128
        $region52: #{tpu_custom_call.1} parent=47 // pred_fallthru
          _
      $region48: #{tpu_custom_call.1} parent=5 // pred_fallthru
        _
    $region6: #{tpu_custom_call.1} parent=1 // loop_footer
      %s18 = sadd.s32 1, %s14
    $region7: #{tpu_custom_call.1} parent=1 // loop_footer_branch
      %13 = sbr.rel target = $region3
    $region8: #{tpu_custom_call.1} parent=1 // loop_exit
      _
    %819 = vsyncpa [#allocation3], 1
    %s820 = scalar_lea.sflag [#allocation3], 1
    %821 = vsyncpa %s820, 1
    %822 = vsyncpa [#allocation4], 1
    %s823 = scalar_lea.sflag [#allocation4], 1
    %824 = vsyncpa %s823, 1

</llo_original>
